<compile_context>
chip_gen: v7x
topology: tpu7x:2x2x1
jax: 0.10.0
libtpu: 0.0.40
codegen_flags: <defaults>
</compile_context>

<pallas_src>
import functools

import numpy as np
import jax
import jax.numpy as jnp
from jax.experimental import pallas as pl
from jax.experimental.pallas import tpu as pltpu


def _round_up(x, m):
    return ((x + m - 1) // m) * m


# ---------------------------------------------------------------------------
# Pallas kernels
# ---------------------------------------------------------------------------

def _linear_kernel(x_ref, w_ref, b_ref, o_ref):
    # x_ref: (tm, K)  w_ref: (K, tn)  b_ref: (1, tn)  o_ref: (tm, tn)
    acc = jnp.dot(x_ref[...], w_ref[...], preferred_element_type=jnp.float32)
    o_ref[...] = (acc + b_ref[...].astype(jnp.float32)).astype(o_ref.dtype)


def pallas_linear(x2d, w, b, *, tm=256, tn=512):
    """y = x2d @ w + b.  x2d: (M, K), w: (K, N) pre-transposed, b: (N,)."""
    M, K = x2d.shape
    Kw, N = w.shape
    assert K == Kw, (K, Kw)
    out_dtype = x2d.dtype

    # Row tiling: large tiles, pad M up (no divisibility assert).
    tm_eff = min(tm, _round_up(M, 8))
    Mp = _round_up(M, tm_eff)
    if Mp != M:
        x2d = jnp.pad(x2d, ((0, Mp - M), (0, 0)))

    # Column tiling: full (lane-dense) N when it fits one tile, else tile N.
    if N <= tn:
        tn_eff, Np = N, N
    else:
        tn_eff = tn
        Np = _round_up(N, tn_eff)
        if Np != N:
            w = jnp.pad(w, ((0, 0), (0, Np - N)))
            b = jnp.pad(b, ((0, Np - N),))
    b2d = b.reshape(1, Np)

    grid = (Mp // tm_eff, Np // tn_eff)
    cost = pl.CostEstimate(
        flops=2 * Mp * K * Np,
        transcendentals=0,
        bytes_accessed=4 * (Mp * K + K * Np + Mp * Np),
    )

    out = pl.pallas_call(
        _linear_kernel,
        out_shape=jax.ShapeDtypeStruct((Mp, Np), out_dtype),
        grid_spec=pltpu.PrefetchScalarGridSpec(
            num_scalar_prefetch=0,
            grid=grid,
            in_specs=[
                pl.BlockSpec((tm_eff, K), lambda i, j: (i, 0)),
                pl.BlockSpec((K, tn_eff), lambda i, j: (0, j)),
                pl.BlockSpec((1, tn_eff), lambda i, j: (0, j)),
            ],
            out_specs=pl.BlockSpec((tm_eff, tn_eff), lambda i, j: (i, j)),
        ),
        compiler_params=pltpu.CompilerParams(
            dimension_semantics=("parallel", "parallel")),
        cost_estimate=cost,
    )(x2d, w, b2d)

    if Mp != M or Np != N:
        out = out[:M, :N]
    return out


def _layernorm_kernel(x_ref, g_ref, b_ref, o_ref, *, eps):
    x = x_ref[...].astype(jnp.float32)
    mu = jnp.mean(x, axis=-1, keepdims=True)
    xc = x - mu
    var = jnp.mean(xc * xc, axis=-1, keepdims=True)
    y = xc * jax.lax.rsqrt(var + eps)
    y = y * g_ref[...].astype(jnp.float32) + b_ref[...].astype(jnp.float32)
    o_ref[...] = y.astype(o_ref.dtype)


def pallas_layernorm(x2d, gamma, beta, *, eps=1e-5, tm=256):
    M, C = x2d.shape
    tm_eff = min(tm, _round_up(M, 8))
    Mp = _round_up(M, tm_eff)
    if Mp != M:
        x2d = jnp.pad(x2d, ((0, Mp - M), (0, 0)))
    g2d = gamma.reshape(1, C)
    b2d = beta.reshape(1, C)
    out = pl.pallas_call(
        functools.partial(_layernorm_kernel, eps=eps),
        out_shape=jax.ShapeDtypeStruct((Mp, C), x2d.dtype),
        grid_spec=pltpu.PrefetchScalarGridSpec(
            num_scalar_prefetch=0,
            grid=(Mp // tm_eff,),
            in_specs=[
                pl.BlockSpec((tm_eff, C), lambda i: (i, 0)),
                pl.BlockSpec((1, C), lambda i: (0, 0)),
                pl.BlockSpec((1, C), lambda i: (0, 0)),
            ],
            out_specs=pl.BlockSpec((tm_eff, C), lambda i: (i, 0)),
        ),
        compiler_params=pltpu.CompilerParams(dimension_semantics=("parallel",)),
    )(x2d, g2d, b2d)
    return out[:M] if Mp != M else out


def _window_attn_kernel(q_ref, k_ref, v_ref, bias_ref, mask_ref, o_ref, *, scale):
    # q/k/v/o refs: (nh, N, hd)   bias_ref: (nh, N, N)   mask_ref: (N, N)
    q = q_ref[...].astype(jnp.float32) * scale
    k = k_ref[...].astype(jnp.float32)
    attn = jnp.einsum("hnd,hmd->hnm", q, k, preferred_element_type=jnp.float32)
    attn = attn + bias_ref[...].astype(jnp.float32) + mask_ref[...].astype(jnp.float32)
    attn = attn - jnp.max(attn, axis=-1, keepdims=True)
    p = jnp.exp(attn)
    p = p / jnp.sum(p, axis=-1, keepdims=True)
    out = jnp.einsum("hnm,hmd->hnd", p, v_ref[...].astype(jnp.float32),
                     preferred_element_type=jnp.float32)
    o_ref[...] = out.astype(o_ref.dtype)


def pallas_window_attention(q, k, v, rel_bias, mask_per_window, *, scale):
    """q,k,v: (B_, nh, N, hd); rel_bias: (nh, N, N); mask_per_window: (B_, N, N)."""
    B_, nh, N, hd = q.shape
    qkv_spec = pl.BlockSpec((None, nh, N, hd), lambda b: (b, 0, 0, 0))
    return pl.pallas_call(
        functools.partial(_window_attn_kernel, scale=scale),
        out_shape=jax.ShapeDtypeStruct((B_, nh, N, hd), q.dtype),
        grid_spec=pltpu.PrefetchScalarGridSpec(
            num_scalar_prefetch=0,
            grid=(B_,),
            in_specs=[
                qkv_spec, qkv_spec, qkv_spec,
                pl.BlockSpec((nh, N, N), lambda b: (0, 0, 0)),
                pl.BlockSpec((None, N, N), lambda b: (b, 0, 0)),
            ],
            out_specs=pl.BlockSpec((None, nh, N, hd), lambda b: (b, 0, 0, 0)),
        ),
        compiler_params=pltpu.CompilerParams(dimension_semantics=("parallel",)),
    )(q, k, v, rel_bias, mask_per_window)


# ---------------------------------------------------------------------------
# Layout glue (matches the PyTorch helpers exactly)
# ---------------------------------------------------------------------------

def window_partition(x, ws):
    B, H, W, C = x.shape
    x = x.reshape(B, H // ws, ws, W // ws, ws, C)
    return jnp.transpose(x, (0, 1, 3, 2, 4, 5)).reshape(-1, ws, ws, C)


def window_reverse(windows, ws, H, W):
    B = windows.shape[0] // ((H // ws) * (W // ws))
    x = windows.reshape(B, H // ws, W // ws, ws, ws, -1)
    return jnp.transpose(x, (0, 1, 3, 2, 4, 5)).reshape(B, H, W, -1)


def make_relative_position_index(ws):
    coords = np.stack(np.meshgrid(np.arange(ws), np.arange(ws), indexing="ij"))
    coords_flatten = coords.reshape(2, -1)
    rel = coords_flatten[:, :, None] - coords_flatten[:, None, :]
    rel = rel.transpose(1, 2, 0).astype(np.int64)
    rel[:, :, 0] += ws - 1
    rel[:, :, 1] += ws - 1
    rel[:, :, 0] *= 2 * ws - 1
    return rel.sum(-1).astype(np.int32)       # (N, N)


def make_shift_attn_mask(H, W, ws, shift):
    Hp = int(np.ceil(H / ws)) * ws
    Wp = int(np.ceil(W / ws)) * ws
    img_mask = np.zeros((1, Hp, Wp, 1), dtype=np.float32)
    slices = (slice(0, -ws), slice(-ws, -shift), slice(-shift, None))
    cnt = 0
    for h in slices:
        for w in slices:
            img_mask[:, h, w, :] = cnt
            cnt += 1
    mw = img_mask.reshape(1, Hp // ws, ws, Wp // ws, ws, 1)
    mw = mw.transpose(0, 1, 3, 2, 4, 5).reshape(-1, ws * ws)
    attn_mask = mw[:, None, :] - mw[:, :, None]
    attn_mask = np.where(attn_mask != 0, -100.0, 0.0).astype(np.float32)
    return jnp.asarray(attn_mask)             # (nW, N, N)


# ---------------------------------------------------------------------------
# BasicLayer forward (Pallas path)
# ---------------------------------------------------------------------------

def window_attention_forward(x_windows, mask, p, *, num_heads, rel_pos_index):
    B_, N, C = x_windows.shape
    hd = C // num_heads
    scale = hd ** (-0.5)

    qkv = pallas_linear(x_windows.reshape(B_ * N, C), p["qkv_w"], p["qkv_b"])
    qkv = jnp.transpose(qkv.reshape(B_, N, 3, num_heads, hd), (2, 0, 3, 1, 4))
    q, k, v = qkv[0], qkv[1], qkv[2]                       # (B_, nh, N, hd)

    rpb = p["rel_pos_table"][rel_pos_index.reshape(-1)]
    rpb = jnp.transpose(rpb.reshape(N, N, num_heads), (2, 0, 1))   # (nh, N, N)

    nW = mask.shape[0]
    mask_full = jnp.broadcast_to(mask[None], (B_ // nW, nW, N, N)).reshape(B_, N, N)

    out = pallas_window_attention(q, k, v, rpb, mask_full, scale=scale)
    out = jnp.transpose(out, (0, 2, 1, 3)).reshape(B_, N, C)
    out = pallas_linear(out.reshape(B_ * N, C), p["proj_w"], p["proj_b"])
    return out.reshape(B_, N, C)


def swin_block_forward(x, H, W, p, attn_mask, *, num_heads, window_size,
                       shift_size, rel_pos_index):
    B, L, C = x.shape
    assert L == H * W, "input feature has wrong size"
    ws = window_size
    shortcut = x

    xn = pallas_layernorm(x.reshape(B * L, C), p["norm1_g"], p["norm1_b"])
    xn = xn.reshape(B, H, W, C)

    pad_r = (ws - W % ws) % ws
    pad_b = (ws - H % ws) % ws
    if pad_r or pad_b:
        xn = jnp.pad(xn, ((0, 0), (0, pad_b), (0, pad_r), (0, 0)))
    Hp, Wp = H + pad_b, W + pad_r
    nW = (Hp // ws) * (Wp // ws)
    N = ws * ws

    if shift_size > 0:
        xs = jnp.roll(xn, shift=(-shift_size, -shift_size), axis=(1, 2))
        mask = attn_mask
    else:
        xs = xn
        mask = jnp.zeros((nW, N, N), dtype=x.dtype)

    x_windows = window_partition(xs, ws).reshape(-1, N, C)
    attn_windows = window_attention_forward(
        x_windows, mask, p, num_heads=num_heads, rel_pos_index=rel_pos_index)
    attn_windows = attn_windows.reshape(-1, ws, ws, C)
    xs = window_reverse(attn_windows, ws, Hp, Wp)

    if shift_size > 0:
        xs = jnp.roll(xs, shift=(shift_size, shift_size), axis=(1, 2))
    if pad_r or pad_b:
        xs = xs[:, :H, :W, :]
    x = shortcut + xs.reshape(B, H * W, C)          # drop_path = Identity

    # MLP branch (exact-erf GELU, matching nn.GELU default)
    y = pallas_layernorm(x.reshape(B * L, C), p["norm2_g"], p["norm2_b"])
    h = pallas_linear(y, p["fc1_w"], p["fc1_b"])
    h = jax.nn.gelu(h, approximate=False)
    h = pallas_linear(h, p["fc2_w"], p["fc2_b"])
    return x + h.reshape(B, L, C)


def basic_layer_forward(x, H, W, params, *, num_heads, window_size):
    """params: list of per-block parameter dicts.  downsample=None (module default)."""
    shift_size = window_size // 2
    rel_pos_index = make_relative_position_index(window_size)
    attn_mask = make_shift_attn_mask(H, W, window_size, shift_size)
    for i, p in enumerate(params):
        ss = 0 if i % 2 == 0 else shift_size
        x = swin_block_forward(x, H, W, p, attn_mask, num_heads=num_heads,
                               window_size=window_size, shift_size=ss,
                               rel_pos_index=rel_pos_index)
    # TODO(synk): optional downsample (PatchMerging) not included; BasicLayer default downsample=None.
    return x, H, W


# ---------------------------------------------------------------------------
# Pure-JAX reference (no Pallas) for correctness checking
# ---------------------------------------------------------------------------

def _ref_layernorm(x, g, b, eps=1e-5):
    mu = jnp.mean(x, axis=-1, keepdims=True)
    var = jnp.mean(jnp.square(x - mu), axis=-1, keepdims=True)
    return (x - mu) * jax.lax.rsqrt(var + eps) * g + b


def basic_layer_reference(x, H, W, params, *, num_heads, window_size):
    HI = jax.lax.Precision.HIGHEST
    ws = window_size
    shift_size = ws // 2
    rel_pos_index = make_relative_position_index(ws)
    attn_mask = make_shift_attn_mask(H, W, ws, shift_size)
    B, L, C = x.shape
    hd = C // num_heads
    scale = hd ** (-0.5)
    N = ws * ws
    for blk_i, p in enumerate(params):
        ss = 0 if blk_i % 2 == 0 else shift_size
        shortcut = x
        xn = _ref_layernorm(x, p["norm1_g"], p["norm1_b"]).reshape(B, H, W, C)
        pad_r = (ws - W % ws) % ws
        pad_b = (ws - H % ws) % ws
        if pad_r or pad_b:
            xn = jnp.pad(xn, ((0, 0), (0, pad_b), (0, pad_r), (0, 0)))
        Hp, Wp = H + pad_b, W + pad_r
        nW = (Hp // ws) * (Wp // ws)
        if ss > 0:
            xn = jnp.roll(xn, shift=(-ss, -ss), axis=(1, 2))
            mask = attn_mask
        else:
            mask = jnp.zeros((nW, N, N), dtype=x.dtype)
        xw = window_partition(xn, ws).reshape(-1, N, C)
        B_ = xw.shape[0]
        qkv = jnp.einsum("bnc,cd->bnd", xw, p["qkv_w"], precision=HI) + p["qkv_b"]
        qkv = jnp.transpose(qkv.reshape(B_, N, 3, num_heads, hd), (2, 0, 3, 1, 4))
        q, k, v = qkv[0] * scale, qkv[1], qkv[2]
        attn = jnp.einsum("bhnd,bhmd->bhnm", q, k, precision=HI)
        rpb = p["rel_pos_table"][rel_pos_index.reshape(-1)].reshape(N, N, num_heads)
        attn = attn + jnp.transpose(rpb, (2, 0, 1))[None]
        mask_full = jnp.broadcast_to(mask[None], (B_ // nW, nW, N, N)).reshape(B_, N, N)
        attn = attn + mask_full[:, None]
        attn = jax.nn.softmax(attn, axis=-1)
        out = jnp.einsum("bhnm,bhmd->bhnd", attn, v, precision=HI)
        out = jnp.transpose(out, (0, 2, 1, 3)).reshape(B_, N, C)
        out = jnp.einsum("bnc,cd->bnd", out, p["proj_w"], precision=HI) + p["proj_b"]
        xr = window_reverse(out.reshape(-1, ws, ws, C), ws, Hp, Wp)
        if ss > 0:
            xr = jnp.roll(xr, shift=(ss, ss), axis=(1, 2))
        if pad_r or pad_b:
            xr = xr[:, :H, :W, :]
        x = shortcut + xr.reshape(B, H * W, C)
        y = _ref_layernorm(x, p["norm2_g"], p["norm2_b"])
        h = jnp.einsum("blc,ch->blh", y, p["fc1_w"], precision=HI) + p["fc1_b"]
        h = jax.nn.gelu(h, approximate=False)
        h = jnp.einsum("blh,hc->blc", h, p["fc2_w"], precision=HI) + p["fc2_b"]
        x = x + h
    return x, H, W


# ---------------------------------------------------------------------------
# Parameter construction & smoke test
# ---------------------------------------------------------------------------

def init_block_params(key, dim, num_heads, window_size, mlp_ratio):
    hidden = int(dim * mlp_ratio)
    num_rel = (2 * window_size - 1) ** 2
    ks = jax.random.split(key, 9)

    def nrm(k, shape, s=0.02):
        return jax.random.normal(k, shape, dtype=jnp.float32) * s

    # Linear weights stored pre-transposed: (in_features, out_features), i.e.
    # PyTorch `weight.T` applied ONCE at parameter-load time (no per-call transpose).
    return {
        "norm1_g": jnp.ones((dim,), jnp.float32),
        "norm1_b": jnp.zeros((dim,), jnp.float32),
        "qkv_w": nrm(ks[0], (dim, 3 * dim)),
        "qkv_b": nrm(ks[1], (3 * dim,)),
        "proj_w": nrm(ks[2], (dim, dim)),
        "proj_b": nrm(ks[3], (dim,)),
        "rel_pos_table": nrm(ks[4], (num_rel, num_heads)),
        "norm2_g": jnp.ones((dim,), jnp.float32),
        "norm2_b": jnp.zeros((dim,), jnp.float32),
        "fc1_w": nrm(ks[5], (dim, hidden)),
        "fc1_b": nrm(ks[6], (hidden,)),
        "fc2_w": nrm(ks[7], (hidden, dim)),
        "fc2_b": nrm(ks[8], (dim,)),
    }


if __name__ == "__main__":
    # Small deterministic config: depth=2 -> one regular + one shifted block.
    B, H, W = 2, 8, 8
    dim, depth, num_heads, window_size, mlp_ratio = 32, 2, 4, 4, 4.0

    key = jax.random.PRNGKey(0)
    kx, kp = jax.random.split(key)
    x = jax.random.normal(kx, (B, H * W, dim), dtype=jnp.float32)
    pkeys = jax.random.split(kp, depth)
    params = [init_block_params(pkeys[i], dim, num_heads, window_size, mlp_ratio)
              for i in range(depth)]

    y, H_out, W_out = basic_layer_forward(x, H, W, params,
                                          num_heads=num_heads,
                                          window_size=window_size)
    jax.block_until_ready(y)

    y_ref, _, _ = basic_layer_reference(x, H, W, params,
                                        num_heads=num_heads,
                                        window_size=window_size)
    assert y.shape == (B, H * W, dim)
    assert H_out == H and W_out == W
    assert jnp.allclose(y, y_ref, atol=2e-3, rtol=2e-3), \
        f"max abs err {float(jnp.max(jnp.abs(y - y_ref)))}"

    print("KERNEL_OK")
</pallas_src>

<mosaic_0001>
module attributes {stable_mosaic.version = 11 : i64} {
  func.func @_layernorm_kernel(%arg0: i32, %arg1: memref<128x32xf32, #tpu.memory_space<vmem>>, %arg2: memref<1x32xf32, #tpu.memory_space<vmem>>, %arg3: memref<1x32xf32, #tpu.memory_space<vmem>>, %arg4: memref<128x32xf32, #tpu.memory_space<vmem>>) attributes {dimension_semantics = [#tpu.dimension_semantics<parallel>], iteration_bounds = array<i64: 1>, scalar_prefetch = 0 : i64, scratch_operands = 0 : i64, tpu.core_type = #tpu.core_type<tc>, window_params = [{transform_indices = @transform_0, window_bounds = array<i64: 128, 32>}, {pipeline_mode = #tpu.pipeline_mode<synchronous>, transform_indices = @transform_1, window_bounds = array<i64: 1, 32>}, {pipeline_mode = #tpu.pipeline_mode<synchronous>, transform_indices = @transform_2, window_bounds = array<i64: 1, 32>}, {transform_indices = @transform_3, window_bounds = array<i64: 128, 32>}]} {
    %c0 = arith.constant 0 : index
    %c0_0 = arith.constant 0 : index
    %0 = vector.load %arg1[%c0, %c0_0] : memref<128x32xf32, #tpu.memory_space<vmem>>, vector<128x32xf32>
    %cst = arith.constant dense<0.000000e+00> : vector<128xf32>
    %1 = vector.multi_reduction <add>, %0, %cst [1] : vector<128x32xf32> to vector<128xf32>
    %2 = vector.shape_cast %1 : vector<128xf32> to vector<128x1xf32>
    %cst_1 = arith.constant 3.200000e+01 : f32
    %3 = vector.broadcast %cst_1 : f32 to vector<128x1xf32>
    %4 = arith.divf %2, %3 : vector<128x1xf32>
    %5 = vector.broadcast %4 : vector<128x1xf32> to vector<128x32xf32>
    %6 = arith.subf %0, %5 : vector<128x32xf32>
    %7 = arith.mulf %6, %6 : vector<128x32xf32>
    %cst_2 = arith.constant dense<0.000000e+00> : vector<128xf32>
    %8 = vector.multi_reduction <add>, %7, %cst_2 [1] : vector<128x32xf32> to vector<128xf32>
    %9 = vector.shape_cast %8 : vector<128xf32> to vector<128x1xf32>
    %cst_3 = arith.constant 3.200000e+01 : f32
    %10 = vector.broadcast %cst_3 : f32 to vector<128x1xf32>
    %11 = arith.divf %9, %10 : vector<128x1xf32>
    %cst_4 = arith.constant 9.99999974E-6 : f32
    %12 = vector.broadcast %cst_4 : f32 to vector<128x1xf32>
    %13 = arith.addf %11, %12 : vector<128x1xf32>
    %14 = math.rsqrt %13 : vector<128x1xf32>
    %15 = vector.broadcast %14 : vector<128x1xf32> to vector<128x32xf32>
    %16 = arith.mulf %6, %15 : vector<128x32xf32>
    %c0_5 = arith.constant 0 : index
    %c0_6 = arith.constant 0 : index
    %17 = vector.load %arg2[%c0_5, %c0_6] : memref<1x32xf32, #tpu.memory_space<vmem>>, vector<1x32xf32>
    %18 = vector.broadcast %17 : vector<1x32xf32> to vector<128x32xf32>
    %19 = arith.mulf %16, %18 : vector<128x32xf32>
    %c0_7 = arith.constant 0 : index
    %c0_8 = arith.constant 0 : index
    %20 = vector.load %arg3[%c0_7, %c0_8] : memref<1x32xf32, #tpu.memory_space<vmem>>, vector<1x32xf32>
    %21 = vector.broadcast %20 : vector<1x32xf32> to vector<128x32xf32>
    %22 = arith.addf %19, %21 : vector<128x32xf32>
    %c0_9 = arith.constant 0 : index
    %c0_10 = arith.constant 0 : index
    %23 = vector.load %arg4[%c0_9, %c0_10] : memref<128x32xf32, #tpu.memory_space<vmem>>, vector<128x32xf32>
    tpu.vector_store %arg4[%c0_9, %c0_10], %22 {strides = array<i32>} : memref<128x32xf32, #tpu.memory_space<vmem>>, vector<128x32xf32>,
    return
  }
  func.func @transform_0(%arg0: i32) -> (i32, i32) {
    %c0_i32 = arith.constant 0 : i32
    %c0_i32_0 = arith.constant 0 : i32
    return %arg0, %c0_i32 : i32, i32
  }
  func.func @transform_1(%arg0: i32) -> (i32, i32) {
    %c0_i32 = arith.constant 0 : i32
    %c0_i32_0 = arith.constant 0 : i32
    %c0_i32_1 = arith.constant 0 : i32
    return %c0_i32, %c0_i32_0 : i32, i32
  }
  func.func @transform_2(%arg0: i32) -> (i32, i32) {
    %c0_i32 = arith.constant 0 : i32
    %c0_i32_0 = arith.constant 0 : i32
    %c0_i32_1 = arith.constant 0 : i32
    return %c0_i32, %c0_i32_0 : i32, i32
  }
  func.func @transform_3(%arg0: i32) -> (i32, i32) {
    %c0_i32 = arith.constant 0 : i32
    %c0_i32_0 = arith.constant 0 : i32
    return %arg0, %c0_i32 : i32, i32
  }
}

</mosaic_0001>

<llo_original>
// kernel: tpu_custom_call.1
$region0: #{tpu_custom_call.1}
  #allocation0 [shape = 'u32[]', space=smem, size = 0x4, offset = 0x4, fixed_abs, tag = 'smem constant byte address 0x4 - core index']
  #allocation1 [shape = 'u32[144,128]{1,0:T(1,128)}', space=vmem, size = 0x12000, scoped, tag = 'internal scratch']
  %s0 = inlined_call_operand.vmem [shape: f32[128,32], index: 0, kind: input, shape index: {}]
  %s1 = inlined_call_operand.vmem [shape: f32[1,32], index: 1, kind: input, shape index: {}]
  %s2 = inlined_call_operand.vmem [shape: f32[1,32], index: 2, kind: input, shape index: {}]
  %s3 = inlined_call_operand.vmem [shape: f32[128,32], index: 3, kind: output, shape index: {}]
  %s4 = sld [smem:[#allocation0]]
  $region22: #{tpu_custom_call.1} parent=0
    _
  %s6 = ssub.s32 1, %s4
  %s7 = scalar_select 0, %s6, %s4
  // Predicated region
  $region2: #{tpu_custom_call.1} parent=0 // pred_check
    _
  $region3: #{tpu_custom_call.1} parent=0 // pred_check_branch
    %9 = sbr.rel (0) target = $region5
  $region4: #{tpu_custom_call.1} parent=0 // pred_region
    _
  $region5: #{tpu_custom_call.1} parent=0 // pred_fallthru
    _
  // Predicated region
  $region6: #{tpu_custom_call.1} parent=0 // pred_check
    _
  $region7: #{tpu_custom_call.1} parent=0 // pred_check_branch
    %11 = sbr.rel (0) target = $region9
  $region8: #{tpu_custom_call.1} parent=0 // pred_region
    _
  $region9: #{tpu_custom_call.1} parent=0 // pred_fallthru
    _
  // Predicated region
  $region10: #{tpu_custom_call.1} parent=0 // pred_check
    _
  $region11: #{tpu_custom_call.1} parent=0 // pred_check_branch
    %13 = sbr.rel (0) target = $region13
  $region12: #{tpu_custom_call.1} parent=0 // pred_region
    _
  $region13: #{tpu_custom_call.1} parent=0 // pred_fallthru
    _
  %v14 = vld [vmem:[%s0] sm:$0xff]
  %v15 = vld [vmem:[%s0 + $0x8] sm:$0xff]
  %v16 = vld [vmem:[%s0 + $0x10] sm:$0xff]
  %v17 = vld [vmem:[%s0 + $0x18] sm:$0xff]
  %v18 = vld [vmem:[%s0 + $0x20] sm:$0xff]
  %v19 = vld [vmem:[%s0 + $0x28] sm:$0xff]
  %v20 = vld [vmem:[%s0 + $0x30] sm:$0xff]
  %v21 = vld [vmem:[%s0 + $0x38] sm:$0xff]
  %v22 = vld [vmem:[%s0 + $0x40] sm:$0xff]
  %v23 = vld [vmem:[%s0 + $0x48] sm:$0xff]
  %v24 = vld [vmem:[%s0 + $0x50] sm:$0xff]
  %v25 = vld [vmem:[%s0 + $0x58] sm:$0xff]
  %v26 = vld [vmem:[%s0 + $0x60] sm:$0xff]
  %v27 = vld [vmem:[%s0 + $0x68] sm:$0xff]
  %v28 = vld [vmem:[%s0 + $0x70] sm:$0xff]
  %v29 = vld [vmem:[%s0 + $0x78] sm:$0xff]
  %vm30 = vcmask 261120
  %v31 = vsel %vm30, %v14, 0.0
  %32 = vadd.xlane.f32.xlu0 %v31
  %v33 = vpop.xlane.xlu0 %32
  %v34 = vsel %vm30, %v15, 0.0
  %35 = vadd.xlane.f32.xlu0 %v34
  %v36 = vpop.xlane.xlu0 %35
  %v37 = vsel %vm30, %v16, 0.0
  %38 = vadd.xlane.f32.xlu0 %v37
  %v39 = vpop.xlane.xlu0 %38
  %v40 = vsel %vm30, %v17, 0.0
  %41 = vadd.xlane.f32.xlu0 %v40
  %v42 = vpop.xlane.xlu0 %41
  %v43 = vsel %vm30, %v18, 0.0
  %44 = vadd.xlane.f32.xlu0 %v43
  %v45 = vpop.xlane.xlu0 %44
  %v46 = vsel %vm30, %v19, 0.0
  %47 = vadd.xlane.f32.xlu0 %v46
  %v48 = vpop.xlane.xlu0 %47
  %v49 = vsel %vm30, %v20, 0.0
  %50 = vadd.xlane.f32.xlu0 %v49
  %v51 = vpop.xlane.xlu0 %50
  %v52 = vsel %vm30, %v21, 0.0
  %53 = vadd.xlane.f32.xlu0 %v52
  %v54 = vpop.xlane.xlu0 %53
  %v55 = vsel %vm30, %v22, 0.0
  %56 = vadd.xlane.f32.xlu0 %v55
  %v57 = vpop.xlane.xlu0 %56
  %v58 = vsel %vm30, %v23, 0.0
  %59 = vadd.xlane.f32.xlu0 %v58
  %v60 = vpop.xlane.xlu0 %59
  %v61 = vsel %vm30, %v24, 0.0
  %62 = vadd.xlane.f32.xlu0 %v61
  %v63 = vpop.xlane.xlu0 %62
  %v64 = vsel %vm30, %v25, 0.0
  %65 = vadd.xlane.f32.xlu0 %v64
  %v66 = vpop.xlane.xlu0 %65
  %v67 = vsel %vm30, %v26, 0.0
  %68 = vadd.xlane.f32.xlu0 %v67
  %v69 = vpop.xlane.xlu0 %68
  %v70 = vsel %vm30, %v27, 0.0
  %71 = vadd.xlane.f32.xlu0 %v70
  %v72 = vpop.xlane.xlu0 %71
  %v73 = vsel %vm30, %v28, 0.0
  %74 = vadd.xlane.f32.xlu0 %v73
  %v75 = vpop.xlane.xlu0 %74
  %v76 = vsel %vm30, %v29, 0.0
  %77 = vadd.xlane.f32.xlu0 %v76
  %v78 = vpop.xlane.xlu0 %77
  %v79 = vrcp.pop 32.0
  %v80 = vmul.f32 %v33, %v79
  %v81 = vmul.f32 %v36, %v79
  %v82 = vmul.f32 %v39, %v79
  %v83 = vmul.f32 %v42, %v79
  %v84 = vmul.f32 %v45, %v79
  %v85 = vmul.f32 %v48, %v79
  %v86 = vmul.f32 %v51, %v79
  %v87 = vmul.f32 %v54, %v79
  %v88 = vmul.f32 %v57, %v79
  %v89 = vmul.f32 %v60, %v79
  %v90 = vmul.f32 %v63, %v79
  %v91 = vmul.f32 %v66, %v79
  %v92 = vmul.f32 %v69, %v79
  %v93 = vmul.f32 %v72, %v79
  %v94 = vmul.f32 %v75, %v79
  %v95 = vmul.f32 %v78, %v79
  %v96 = vsub.f32 %v14, %v80
  %v97 = vsub.f32 %v15, %v81
  %v98 = vsub.f32 %v16, %v82
  %v99 = vsub.f32 %v17, %v83
  %v100 = vsub.f32 %v18, %v84
  %v101 = vsub.f32 %v19, %v85
  %v102 = vsub.f32 %v20, %v86
  %v103 = vsub.f32 %v21, %v87
  %v104 = vsub.f32 %v22, %v88
  %v105 = vsub.f32 %v23, %v89
  %v106 = vsub.f32 %v24, %v90
  %v107 = vsub.f32 %v25, %v91
  %v108 = vsub.f32 %v26, %v92
  %v109 = vsub.f32 %v27, %v93
  %v110 = vsub.f32 %v28, %v94
  %v111 = vsub.f32 %v29, %v95
  %v112 = vmul.f32 %v96, %v96
  %v113 = vmul.f32 %v97, %v97
  %v114 = vmul.f32 %v98, %v98
  %v115 = vmul.f32 %v99, %v99
  %v116 = vmul.f32 %v100, %v100
  %v117 = vmul.f32 %v101, %v101
  %v118 = vmul.f32 %v102, %v102
  %v119 = vmul.f32 %v103, %v103
  %v120 = vmul.f32 %v104, %v104
  %v121 = vmul.f32 %v105, %v105
  %v122 = vmul.f32 %v106, %v106
  %v123 = vmul.f32 %v107, %v107
  %v124 = vmul.f32 %v108, %v108
  %v125 = vmul.f32 %v109, %v109
  %v126 = vmul.f32 %v110, %v110
  %v127 = vmul.f32 %v111, %v111
  %v128 = vsel %vm30, %v112, 0.0
  %129 = vadd.xlane.f32.xlu0 %v128
  %v130 = vpop.xlane.xlu0 %129
  %v131 = vsel %vm30, %v113, 0.0
  %132 = vadd.xlane.f32.xlu0 %v131
  %v133 = vpop.xlane.xlu0 %132
  %v134 = vsel %vm30, %v114, 0.0
  %135 = vadd.xlane.f32.xlu0 %v134
  %v136 = vpop.xlane.xlu0 %135
  %v137 = vsel %vm30, %v115, 0.0
  %138 = vadd.xlane.f32.xlu0 %v137
  %v139 = vpop.xlane.xlu0 %138
  %v140 = vsel %vm30, %v116, 0.0
  %141 = vadd.xlane.f32.xlu0 %v140
  %v142 = vpop.xlane.xlu0 %141
  %v143 = vsel %vm30, %v117, 0.0
  %144 = vadd.xlane.f32.xlu0 %v143
  %v145 = vpop.xlane.xlu0 %144
  %v146 = vsel %vm30, %v118, 0.0
  %147 = vadd.xlane.f32.xlu0 %v146
  %v148 = vpop.xlane.xlu0 %147
  %v149 = vsel %vm30, %v119, 0.0
  %150 = vadd.xlane.f32.xlu0 %v149
  %v151 = vpop.xlane.xlu0 %150
  %v152 = vsel %vm30, %v120, 0.0
  %153 = vadd.xlane.f32.xlu0 %v152
  %v154 = vpop.xlane.xlu0 %153
  %v155 = vsel %vm30, %v121, 0.0
  %156 = vadd.xlane.f32.xlu0 %v155
  %v157 = vpop.xlane.xlu0 %156
  %v158 = vsel %vm30, %v122, 0.0
  %159 = vadd.xlane.f32.xlu0 %v158
  %v160 = vpop.xlane.xlu0 %159
  %v161 = vsel %vm30, %v123, 0.0
  %162 = vadd.xlane.f32.xlu0 %v161
  %v163 = vpop.xlane.xlu0 %162
  %v164 = vsel %vm30, %v124, 0.0
  %165 = vadd.xlane.f32.xlu0 %v164
  %v166 = vpop.xlane.xlu0 %165
  %v167 = vsel %vm30, %v125, 0.0
  %168 = vadd.xlane.f32.xlu0 %v167
  %v169 = vpop.xlane.xlu0 %168
  %v170 = vsel %vm30, %v126, 0.0
  %171 = vadd.xlane.f32.xlu0 %v170
  %v172 = vpop.xlane.xlu0 %171
  %v173 = vsel %vm30, %v127, 0.0
  %174 = vadd.xlane.f32.xlu0 %v173
  %v175 = vpop.xlane.xlu0 %174
  %v176 = vmul.f32 %v130, %v79
  %v177 = vmul.f32 %v133, %v79
  %v178 = vmul.f32 %v136, %v79
  %v179 = vmul.f32 %v139, %v79
  %v180 = vmul.f32 %v142, %v79
  %v181 = vmul.f32 %v145, %v79
  %v182 = vmul.f32 %v148, %v79
  %v183 = vmul.f32 %v151, %v79
  %v184 = vmul.f32 %v154, %v79
  %v185 = vmul.f32 %v157, %v79
  %v186 = vmul.f32 %v160, %v79
  %v187 = vmul.f32 %v163, %v79
  %v188 = vmul.f32 %v166, %v79
  %v189 = vmul.f32 %v169, %v79
  %v190 = vmul.f32 %v172, %v79
  %v191 = vmul.f32 %v175, %v79
  %v192 = vadd.f32 %v176, 1e-05
  %v193 = vadd.f32 %v177, 1e-05
  %v194 = vadd.f32 %v178, 1e-05
  %v195 = vadd.f32 %v179, 1e-05
  %v196 = vadd.f32 %v180, 1e-05
  %v197 = vadd.f32 %v181, 1e-05
  %v198 = vadd.f32 %v182, 1e-05
  %v199 = vadd.f32 %v183, 1e-05
  %v200 = vadd.f32 %v184, 1e-05
  %v201 = vadd.f32 %v185, 1e-05
  %v202 = vadd.f32 %v186, 1e-05
  %v203 = vadd.f32 %v187, 1e-05
  %v204 = vadd.f32 %v188, 1e-05
  %v205 = vadd.f32 %v189, 1e-05
  %v206 = vadd.f32 %v190, 1e-05
  %v207 = vadd.f32 %v191, 1e-05
  %v208 = vrsqrt.pop %v192
  %v209 = vrsqrt.pop %v193
  %v210 = vrsqrt.pop %v194
  %v211 = vrsqrt.pop %v195
  %v212 = vrsqrt.pop %v196
  %v213 = vrsqrt.pop %v197
  %v214 = vrsqrt.pop %v198
  %v215 = vrsqrt.pop %v199
  %v216 = vrsqrt.pop %v200
  %v217 = vrsqrt.pop %v201
  %v218 = vrsqrt.pop %v202
  %v219 = vrsqrt.pop %v203
  %v220 = vrsqrt.pop %v204
  %v221 = vrsqrt.pop %v205
  %v222 = vrsqrt.pop %v206
  %v223 = vrsqrt.pop %v207
  %v224 = vmul.f32 %v96, %v208
  %v225 = vmul.f32 %v97, %v209
  %v226 = vmul.f32 %v98, %v210
  %v227 = vmul.f32 %v99, %v211
  %v228 = vmul.f32 %v100, %v212
  %v229 = vmul.f32 %v101, %v213
  %v230 = vmul.f32 %v102, %v214
  %v231 = vmul.f32 %v103, %v215
  %v232 = vmul.f32 %v104, %v216
  %v233 = vmul.f32 %v105, %v217
  %v234 = vmul.f32 %v106, %v218
  %v235 = vmul.f32 %v107, %v219
  %v236 = vmul.f32 %v108, %v220
  %v237 = vmul.f32 %v109, %v221
  %v238 = vmul.f32 %v110, %v222
  %v239 = vmul.f32 %v111, %v223
  %v240 = vld [vmem:[%s1] sm:$0x1]
  %v242 = vlaneseq
  %v243 = vshrl.u32 %v242, 7
  %v244 = vsub.s32 0, %v243
  %v245 = vrot.slane %v240, %v244
  %v247 = vmul.f32 %v224, %v245
  %v248 = vmul.f32 %v225, %v245
  %v249 = vmul.f32 %v226, %v245
  %v250 = vmul.f32 %v227, %v245
  %v251 = vmul.f32 %v228, %v245
  %v252 = vmul.f32 %v229, %v245
  %v253 = vmul.f32 %v230, %v245
  %v254 = vmul.f32 %v231, %v245
  %v255 = vmul.f32 %v232, %v245
  %v256 = vmul.f32 %v233, %v245
  %v257 = vmul.f32 %v234, %v245
  %v258 = vmul.f32 %v235, %v245
  %v259 = vmul.f32 %v236, %v245
  %v260 = vmul.f32 %v237, %v245
  %v261 = vmul.f32 %v238, %v245
  %v262 = vmul.f32 %v239, %v245
  %v263 = vld [vmem:[%s2] sm:$0x1]
  %v265 = vlaneseq
  %v266 = vshrl.u32 %v265, 7
  %v267 = vsub.s32 0, %v266
  %v268 = vrot.slane %v263, %v267
  %v270 = vadd.f32 %v247, %v268
  %v271 = vadd.f32 %v248, %v268
  %v272 = vadd.f32 %v249, %v268
  %v273 = vadd.f32 %v250, %v268
  %v274 = vadd.f32 %v251, %v268
  %v275 = vadd.f32 %v252, %v268
  %v276 = vadd.f32 %v253, %v268
  %v277 = vadd.f32 %v254, %v268
  %v278 = vadd.f32 %v255, %v268
  %v279 = vadd.f32 %v256, %v268
  %v280 = vadd.f32 %v257, %v268
  %v281 = vadd.f32 %v258, %v268
  %v282 = vadd.f32 %v259, %v268
  %v283 = vadd.f32 %v260, %v268
  %v284 = vadd.f32 %v261, %v268
  %v285 = vadd.f32 %v262, %v268
  %286 = vst.msk [vmem:[%s3] sm:$0xff] %vm30, %v270
  %287 = vst.msk [vmem:[%s3 + $0x8] sm:$0xff] %vm30, %v271
  %288 = vst.msk [vmem:[%s3 + $0x10] sm:$0xff] %vm30, %v272
  %289 = vst.msk [vmem:[%s3 + $0x18] sm:$0xff] %vm30, %v273
  %290 = vst.msk [vmem:[%s3 + $0x20] sm:$0xff] %vm30, %v274
  %291 = vst.msk [vmem:[%s3 + $0x28] sm:$0xff] %vm30, %v275
  %292 = vst.msk [vmem:[%s3 + $0x30] sm:$0xff] %vm30, %v276
  %293 = vst.msk [vmem:[%s3 + $0x38] sm:$0xff] %vm30, %v277
  %294 = vst.msk [vmem:[%s3 + $0x40] sm:$0xff] %vm30, %v278
  %295 = vst.msk [vmem:[%s3 + $0x48] sm:$0xff] %vm30, %v279
  %296 = vst.msk [vmem:[%s3 + $0x50] sm:$0xff] %vm30, %v280
  %297 = vst.msk [vmem:[%s3 + $0x58] sm:$0xff] %vm30, %v281
  %298 = vst.msk [vmem:[%s3 + $0x60] sm:$0xff] %vm30, %v282
  %299 = vst.msk [vmem:[%s3 + $0x68] sm:$0xff] %vm30, %v283
  %300 = vst.msk [vmem:[%s3 + $0x70] sm:$0xff] %vm30, %v284
  %301 = vst.msk [vmem:[%s3 + $0x78] sm:$0xff] %vm30, %v285
  // Predicated region
  $region14: #{tpu_custom_call.1} parent=0 // pred_check
    _
  $region15: #{tpu_custom_call.1} parent=0 // pred_check_branch
    %303 = sbr.rel (0) target = $region17
  $region16: #{tpu_custom_call.1} parent=0 // pred_region
    _
  $region17: #{tpu_custom_call.1} parent=0 // pred_fallthru
    _
  // Predicated region
  $region18: #{tpu_custom_call.1} parent=0 // pred_check
    _
  $region19: #{tpu_custom_call.1} parent=0 // pred_check_branch
    %305 = sbr.rel (0) target = $region21
  $region20: #{tpu_custom_call.1} parent=0 // pred_region
    _
  $region21: #{tpu_custom_call.1} parent=0 // pred_fallthru
    _

</llo_original>
